<compile_context>
chip_gen: v7x
topology: tpu7x:2x2x1
jax: 0.10.0
libtpu: 0.0.40
codegen_flags: <defaults>
</compile_context>

<pallas_src>
import functools

import jax
import jax.numpy as jnp
from jax import lax
from jax.experimental import pallas as pl
from jax.experimental.pallas import tpu as pltpu

# Conservative budget that fits v5e/v6e (128 MiB) and v7x (64 MiB).  On v6e a
# larger budget (~96 MiB) with a bigger q-tile further amortizes per-step cost.
_VMEM_LIMIT = 48 * 1024 * 1024


# ----------------------------------------------------------------------------
# Pass 1: RMSNorm + fused Q / shared-K / shared-V projections, computed exactly
# once per (batch, seq-tile).  Multi-query attention -> K/V have a single head.
# ----------------------------------------------------------------------------
def _qkv_proj_kernel(x_ref, g_ref, wq_ref, wk_ref, wv_ref,
                     q_ref, k_ref, v_ref, *, heads, dim_head, eps):
    # x_ref: (1, tn, dim) bf16      g_ref: (1, dim) f32
    # wq_ref: (dim, heads*dh) bf16 (softmax scale pre-folded)
    # wk_ref/wv_ref: (dim, dh) bf16
    # q_ref: (1, heads, tn, dh) bf16   k_ref/v_ref: (1, tn, dh) bf16
    dim = x_ref.shape[2]
    x = x_ref[0].astype(jnp.float32)                      # (tn, dim)
    g = g_ref[...].astype(jnp.float32)                    # (1, dim)

    ss = jnp.sum(x * x, axis=-1, keepdims=True)
    norm = jnp.sqrt(ss) * (dim ** -0.5)
    # clamp(min=eps) then divide; reciprocal goes to the EUP slot (nearly free).
    inv = pl.reciprocal(jnp.maximum(norm, eps), approx=True)
    xn = (x * inv * g).astype(jnp.bfloat16)               # (tn, dim)

    q_all = jnp.dot(xn, wq_ref[...],
                    preferred_element_type=jnp.float32)   # (tn, heads*dh)
    # Write q per head -> downstream kernel sees heads stacked along sublanes.
    for h in range(heads):
        q_ref[0, h] = q_all[:, h * dim_head:(h + 1) * dim_head].astype(q_ref.dtype)

    k_ref[0] = jnp.dot(xn, wk_ref[...],
                       preferred_element_type=jnp.float32).astype(k_ref.dtype)
    v_ref[0] = jnp.dot(xn, wv_ref[...],
                       preferred_element_type=jnp.float32).astype(v_ref.dtype)


# ----------------------------------------------------------------------------
# Pass 2: causal multi-query attention + output projection, one query tile per
# grid step, all heads stacked along the sublane (row) axis.
# ----------------------------------------------------------------------------
def _attention_kernel(q_ref, k_ref, v_ref, wo_ref, *rest,
                      heads, dim_head, has_bias):
    # q_ref:  (1, heads, tq, dh) bf16 (scale folded into Wq)
    # k_ref:  (1, n, dh) bf16   v_ref: (1, n, dh) bf16   (shared MQA head;
    #         index map is constant in the q axis -> stays resident in VMEM)
    # wo_ref: (heads*dh, dim) bf16
    # rest:   [bias_ref (heads, tq, n) bf16] + o_ref (1, tq, dim)
    if has_bias:
        bias_ref, o_ref = rest
    else:
        bias_ref = None
        (o_ref,) = rest

    tq = q_ref.shape[2]
    n = k_ref.shape[1]
    rows = heads * tq
    q_start = pl.program_id(1) * tq

    # Head-major stacking: row r = h*tq + token.  Leading-dim collapse only
    # (last dim unchanged) -> no lane relayout.
    q = q_ref[0].reshape(rows, dim_head)                  # (heads*tq, dh) bf16
    k = k_ref[0]                                          # (n, dh) bf16
    v = v_ref[0]                                          # (n, dh) bf16

    # ONE score matmul for all heads against the shared K (no k.T materialized).
    contract_last = (((1,), (1,)), ((), ()))
    sim = lax.dot_general(q, k, contract_last,
                          preferred_element_type=jnp.float32)   # (rows, n) f32
    if has_bias:
        # bias block is (heads, tq, n): same (head, token) row order as q.
        sim = sim + bias_ref[...].reshape(rows, n).astype(jnp.float32)

    # Causal mask: token index of stacked row r is (r mod tq) + tile offset.
    row_tok = (lax.broadcasted_iota(jnp.int32, (heads, tq, n), 1)
               .reshape(rows, n) + q_start)
    col = lax.broadcasted_iota(jnp.int32, (rows, n), 1)
    neg_max = -jnp.finfo(jnp.float32).max
    sim = jnp.where(col > row_tok, neg_max, sim)

    # fp32 softmax statistics; approximate reciprocal on the EUP (documented:
    # error ~1e-4 relative, far below the bf16 rounding already present).
    m = jnp.max(sim, axis=-1, keepdims=True)
    p = jnp.exp(sim - m)
    denom = jnp.sum(p, axis=-1, keepdims=True)
    attn = (p * pl.reciprocal(denom, approx=True)).astype(jnp.bfloat16)

    # ONE AV matmul for all heads against the shared V.
    av = jnp.dot(attn, v, preferred_element_type=jnp.float32)   # (rows, dh) f32

    # Per-head row blocks are contiguous -> reassemble (tq, heads*dh) with
    # static slices + a lane concat, then a single lane-dense output projection
    # (== concat over heads + matmul in the reference).
    out_all = jnp.concatenate(
        [av[h * tq:(h + 1) * tq, :] for h in range(heads)], axis=-1
    ).astype(jnp.bfloat16)                                      # (tq, inner)
    out = jnp.dot(out_all, wo_ref[...], preferred_element_type=jnp.float32)
    o_ref[0] = out.astype(o_ref.dtype)


def _pick_tile(n, cap=256):
    """Largest tile (<=cap, multiple of 8) dividing n; else the whole axis.

    cap=256 is safe on every generation; on v6e (128 MiB VMEM) cap=512 with a
    larger _VMEM_LIMIT amortizes per-step overhead further.
    """
    for cand in (512, 256, 128, 64, 32, 16, 8):
        if cand <= cap and n % cand == 0:
            return cand
    return n


def attention_forward(x, params, attn_bias=None, *, heads, dim_head, eps=1e-8,
                      q_tile=None):
    """Pallas forward pass of MEGABYTE Attention.  x: (b, n, dim) float32."""
    b, n, dim = x.shape
    inner = heads * dim_head
    scale = dim_head ** -0.5

    tq = _pick_tile(n) if q_tile is None else q_tile
    assert n % tq == 0, (n, tq)
    nq = n // tq

    # bf16 at the pallas_call boundary halves DMA bytes; accumulation and all
    # statistics stay fp32 inside the kernels.
    x_bf = x.astype(jnp.bfloat16)
    g = params["g"].reshape(1, dim).astype(jnp.float32)
    wq = (params["wq"] * scale).astype(jnp.bfloat16)            # scale folded in
    wk = params["wkv"][:, :dim_head].astype(jnp.bfloat16)
    wv = params["wkv"][:, dim_head:].astype(jnp.bfloat16)
    wo = params["wo"].astype(jnp.bfloat16)

    # ---- pass 1: RMSNorm + Q/K/V projections, each token computed ONCE -----
    q, k, v = pl.pallas_call(
        functools.partial(_qkv_proj_kernel, heads=heads, dim_head=dim_head,
                          eps=eps),
        out_shape=(jax.ShapeDtypeStruct((b, heads, n, dim_head), jnp.bfloat16),
                   jax.ShapeDtypeStruct((b, n, dim_head), jnp.bfloat16),
                   jax.ShapeDtypeStruct((b, n, dim_head), jnp.bfloat16)),
        grid_spec=pltpu.PrefetchScalarGridSpec(
            num_scalar_prefetch=0,
            grid=(b, nq),
            in_specs=[
                pl.BlockSpec((1, tq, dim), lambda bi, ti: (bi, ti, 0)),
                pl.BlockSpec((1, dim), lambda bi, ti: (0, 0)),
                pl.BlockSpec((dim, inner), lambda bi, ti: (0, 0)),
                pl.BlockSpec((dim, dim_head), lambda bi, ti: (0, 0)),
                pl.BlockSpec((dim, dim_head), lambda bi, ti: (0, 0)),
            ],
            out_specs=[
                pl.BlockSpec((1, heads, tq, dim_head),
                             lambda bi, ti: (bi, 0, ti, 0)),
                pl.BlockSpec((1, tq, dim_head), lambda bi, ti: (bi, ti, 0)),
                pl.BlockSpec((1, tq, dim_head), lambda bi, ti: (bi, ti, 0)),
            ]),
        compiler_params=pltpu.CompilerParams(
            dimension_semantics=("parallel", "parallel"),
            vmem_limit_bytes=_VMEM_LIMIT),
    )(x_bf, g, wq, wk, wv)

    # ---- pass 2: causal MQA attention + output projection -------------------
    has_bias = attn_bias is not None
    args = [q, k, v, wo]
    in_specs = [
        pl.BlockSpec((1, heads, tq, dim_head), lambda bi, qi: (bi, 0, qi, 0)),
        pl.BlockSpec((1, n, dim_head), lambda bi, qi: (bi, 0, 0)),   # resident
        pl.BlockSpec((1, n, dim_head), lambda bi, qi: (bi, 0, 0)),   # resident
        pl.BlockSpec((inner, dim), lambda bi, qi: (0, 0)),
    ]
    if has_bias:
        bias = jnp.asarray(attn_bias)
        assert bias.ndim <= 3 and bias.shape[-2:] == (n, n), (
            "attn_bias must be batch-independent and broadcastable to "
            f"(heads, n, n); got {bias.shape}")
        # bf16 bias halves its HBM traffic / double-buffered VMEM footprint.
        bias_bf = jnp.broadcast_to(bias, (heads, n, n)).astype(jnp.bfloat16)
        args.append(bias_bf)
        in_specs.append(pl.BlockSpec((heads, tq, n), lambda bi, qi: (0, qi, 0)))

    kernel = functools.partial(_attention_kernel, heads=heads,
                               dim_head=dim_head, has_bias=has_bias)

    # TODO(synk): for very long sequences add a kv grid axis with flash-style
    # online softmax + causal block skipping instead of full-row (rows, n) scores.
    return pl.pallas_call(
        kernel,
        out_shape=jax.ShapeDtypeStruct((b, n, dim), x.dtype),
        grid_spec=pltpu.PrefetchScalarGridSpec(
            num_scalar_prefetch=0,
            grid=(b, nq),
            in_specs=in_specs,
            out_specs=pl.BlockSpec((1, tq, dim), lambda bi, qi: (bi, qi, 0)),
        ),
        compiler_params=pltpu.CompilerParams(
            dimension_semantics=("parallel", "parallel"),
            vmem_limit_bytes=_VMEM_LIMIT),
    )(*args)


def attention_reference(x, params, attn_bias=None, *, heads, dim_head, eps=1e-8):
    """Pure-JAX fp32 reference mirroring the PyTorch module exactly."""
    b, n, dim = x.shape
    g, wq, wkv, wo = params["g"], params["wq"], params["wkv"], params["wo"]
    norm = jnp.linalg.norm(x, axis=-1, keepdims=True) * (dim ** -0.5)
    xn = x / jnp.maximum(norm, eps) * g
    q = xn @ wq                                              # (b, n, h*d)
    kv = xn @ wkv
    k, v = kv[..., :dim_head], kv[..., dim_head:]            # (b, n, d)
    q = q.reshape(b, n, heads, dim_head).transpose(0, 2, 1, 3)
    sim = jnp.einsum('bhid,bjd->bhij', q, k) * (dim_head ** -0.5)
    if attn_bias is not None:
        sim = sim + attn_bias
    mask = jnp.triu(jnp.ones((n, n), bool), 1)
    sim = jnp.where(mask, -jnp.finfo(jnp.float32).max, sim)
    attn = jax.nn.softmax(sim, axis=-1)
    out = jnp.einsum('bhij,bjd->bhid', attn, v)
    out = out.transpose(0, 2, 1, 3).reshape(b, n, heads * dim_head)
    return out @ wo


if __name__ == "__main__":
    # Small shapes consistent with the module: dim=32, heads=4, dim_head=16.
    b, n, dim = 2, 16, 32
    heads, dim_head = 4, 16
    inner = heads * dim_head

    key = jax.random.PRNGKey(0)
    kx, kq, kkv, ko, kb = jax.random.split(key, 5)
    x = jax.random.normal(kx, (b, n, dim), jnp.float32)
    params = {
        "g": jnp.ones((dim,), jnp.float32),                  # RMSNorm.g init = ones
        "wq": jax.random.normal(kq, (dim, inner), jnp.float32) * (dim ** -0.5),
        "wkv": jax.random.normal(kkv, (dim, 2 * dim_head), jnp.float32) * (dim ** -0.5),
        "wo": jax.random.normal(ko, (inner, dim), jnp.float32) * (inner ** -0.5),
    }

    # --- attn_bias=None path: specialized kernel, no zero-bias DMA -----------
    out = attention_forward(x, params, heads=heads, dim_head=dim_head)
    out = jax.block_until_ready(out)
    ref = attention_reference(x, params, heads=heads, dim_head=dim_head)
    assert out.shape == (b, n, dim)
    # bf16 MXU inputs / bf16 x at the boundary -> relaxed tolerance vs fp32 ref.
    assert jnp.allclose(out, ref, atol=5e-2, rtol=5e-2), "mismatch (no bias)"

    # --- additive attention-bias path -----------------------------------------
    attn_bias = 0.1 * jax.random.normal(kb, (heads, n, n), jnp.float32)
    out_b = attention_forward(x, params, attn_bias, heads=heads, dim_head=dim_head)
    out_b = jax.block_until_ready(out_b)
    ref_b = attention_reference(x, params, attn_bias, heads=heads, dim_head=dim_head)
    assert jnp.allclose(out_b, ref_b, atol=5e-2, rtol=5e-2), "mismatch (bias)"

    print("KERNEL_OK")
</pallas_src>

<mosaic_0001>
module attributes {stable_mosaic.version = 11 : i64} {
  func.func @_qkv_proj_kernel(%arg0: i32, %arg1: i32, %arg2: memref<1x16x32xbf16, #tpu.memory_space<vmem>>, %arg3: memref<1x32xf32, #tpu.memory_space<vmem>>, %arg4: memref<32x64xbf16, #tpu.memory_space<vmem>>, %arg5: memref<32x16xbf16, #tpu.memory_space<vmem>>, %arg6: memref<32x16xbf16, #tpu.memory_space<vmem>>, %arg7: memref<1x4x16x16xbf16, #tpu.memory_space<vmem>>, %arg8: memref<1x16x16xbf16, #tpu.memory_space<vmem>>, %arg9: memref<1x16x16xbf16, #tpu.memory_space<vmem>>) attributes {dimension_semantics = [#tpu.dimension_semantics<parallel>, #tpu.dimension_semantics<parallel>], iteration_bounds = array<i64: 2, 1>, scalar_prefetch = 0 : i64, scratch_operands = 0 : i64, tpu.core_type = #tpu.core_type<tc>, window_params = [{transform_indices = @transform_0, window_bounds = array<i64: 1, 16, 32>}, {pipeline_mode = #tpu.pipeline_mode<synchronous>, transform_indices = @transform_1, window_bounds = array<i64: 1, 32>}, {pipeline_mode = #tpu.pipeline_mode<synchronous>, transform_indices = @transform_2, window_bounds = array<i64: 32, 64>}, {pipeline_mode = #tpu.pipeline_mode<synchronous>, transform_indices = @transform_3, window_bounds = array<i64: 32, 16>}, {pipeline_mode = #tpu.pipeline_mode<synchronous>, transform_indices = @transform_4, window_bounds = array<i64: 32, 16>}, {transform_indices = @transform_5, window_bounds = array<i64: 1, 4, 16, 16>}, {transform_indices = @transform_6, window_bounds = array<i64: 1, 16, 16>}, {transform_indices = @transform_7, window_bounds = array<i64: 1, 16, 16>}]} {
    %c0 = arith.constant 0 : index
    %c0_0 = arith.constant 0 : index
    %c0_1 = arith.constant 0 : index
    %0 = vector.load %arg2[%c0, %c0_0, %c0_1] : memref<1x16x32xbf16, #tpu.memory_space<vmem>>, vector<1x16x32xbf16>
    %1 = vector.shape_cast %0 : vector<1x16x32xbf16> to vector<16x32xbf16>
    %2 = arith.extf %1 : vector<16x32xbf16> to vector<16x32xf32>
    %c0_2 = arith.constant 0 : index
    %c0_3 = arith.constant 0 : index
    %3 = vector.load %arg3[%c0_2, %c0_3] : memref<1x32xf32, #tpu.memory_space<vmem>>, vector<1x32xf32>
    %4 = arith.mulf %2, %2 : vector<16x32xf32>
    %cst = arith.constant dense<0.000000e+00> : vector<16xf32>
    %5 = vector.multi_reduction <add>, %4, %cst [1] : vector<16x32xf32> to vector<16xf32>
    %6 = vector.shape_cast %5 : vector<16xf32> to vector<16x1xf32>
    %7 = math.sqrt %6 : vector<16x1xf32>
    %cst_4 = arith.constant 0.176776692 : f32
    %8 = vector.broadcast %cst_4 : f32 to vector<16x1xf32>
    %9 = arith.mulf %7, %8 : vector<16x1xf32>
    %cst_5 = arith.constant 9.99999993E-9 : f32
    %10 = vector.broadcast %cst_5 : f32 to vector<16x1xf32>
    %11 = arith.maximumf %9, %10 : vector<16x1xf32>
    %12 = tpu.reciprocal %11 {approx = true} : vector<16x1xf32> -> vector<16x1xf32>
    %13 = vector.broadcast %12 : vector<16x1xf32> to vector<16x32xf32>
    %14 = arith.mulf %2, %13 : vector<16x32xf32>
    %15 = vector.broadcast %3 : vector<1x32xf32> to vector<16x32xf32>
    %16 = arith.mulf %14, %15 : vector<16x32xf32>
    %17 = arith.truncf %16 : vector<16x32xf32> to vector<16x32xbf16>
    %c0_6 = arith.constant 0 : index
    %c0_7 = arith.constant 0 : index
    %18 = vector.load %arg4[%c0_6, %c0_7] : memref<32x64xbf16, #tpu.memory_space<vmem>>, vector<32x64xbf16>
    %cst_8 = arith.constant dense<0.000000e+00> : vector<16x64xf32>
    %19 = tpu.matmul %17, %18, %cst_8 {dimension_numbers = #tpu.dot_dimension_numbers<[1], [0], [0], [1], [0, 0, 1, 1], [], []>} : vector<16x32xbf16>, vector<32x64xbf16>, vector<16x64xf32> -> vector<16x64xf32>
    %20 = vector.extract_strided_slice %19 {offsets = [0, 0], sizes = [16, 16], strides = [1, 1]} : vector<16x64xf32> to vector<16x16xf32>
    %21 = arith.truncf %20 : vector<16x16xf32> to vector<16x16xbf16>
    %c0_9 = arith.constant 0 : index
    %c0_10 = arith.constant 0 : index
    %c0_11 = arith.constant 0 : index
    %c0_12 = arith.constant 0 : index
    %22 = vector.load %arg7[%c0_9, %c0_10, %c0_11, %c0_12] : memref<1x4x16x16xbf16, #tpu.memory_space<vmem>>, vector<1x1x16x16xbf16>
    %23 = vector.shape_cast %22 : vector<1x1x16x16xbf16> to vector<16x16xbf16>
    %24 = vector.shape_cast %21 : vector<16x16xbf16> to vector<1x1x16x16xbf16>
    tpu.vector_store %arg7[%c0_9, %c0_10, %c0_11, %c0_12], %24 {strides = array<i32>} : memref<1x4x16x16xbf16, #tpu.memory_space<vmem>>, vector<1x1x16x16xbf16>,
    %25 = vector.extract_strided_slice %19 {offsets = [0, 16], sizes = [16, 16], strides = [1, 1]} : vector<16x64xf32> to vector<16x16xf32>
    %26 = arith.truncf %25 : vector<16x16xf32> to vector<16x16xbf16>
    %c0_13 = arith.constant 0 : index
    %c1 = arith.constant 1 : index
    %c0_14 = arith.constant 0 : index
    %c0_15 = arith.constant 0 : index
    %27 = vector.load %arg7[%c0_13, %c1, %c0_14, %c0_15] : memref<1x4x16x16xbf16, #tpu.memory_space<vmem>>, vector<1x1x16x16xbf16>
    %28 = vector.shape_cast %27 : vector<1x1x16x16xbf16> to vector<16x16xbf16>
    %29 = vector.shape_cast %26 : vector<16x16xbf16> to vector<1x1x16x16xbf16>
    tpu.vector_store %arg7[%c0_13, %c1, %c0_14, %c0_15], %29 {strides = array<i32>} : memref<1x4x16x16xbf16, #tpu.memory_space<vmem>>, vector<1x1x16x16xbf16>,
    %30 = vector.extract_strided_slice %19 {offsets = [0, 32], sizes = [16, 16], strides = [1, 1]} : vector<16x64xf32> to vector<16x16xf32>
    %31 = arith.truncf %30 : vector<16x16xf32> to vector<16x16xbf16>
    %c0_16 = arith.constant 0 : index
    %c2 = arith.constant 2 : index
    %c0_17 = arith.constant 0 : index
    %c0_18 = arith.constant 0 : index
    %32 = vector.load %arg7[%c0_16, %c2, %c0_17, %c0_18] : memref<1x4x16x16xbf16, #tpu.memory_space<vmem>>, vector<1x1x16x16xbf16>
    %33 = vector.shape_cast %32 : vector<1x1x16x16xbf16> to vector<16x16xbf16>
    %34 = vector.shape_cast %31 : vector<16x16xbf16> to vector<1x1x16x16xbf16>
    tpu.vector_store %arg7[%c0_16, %c2, %c0_17, %c0_18], %34 {strides = array<i32>} : memref<1x4x16x16xbf16, #tpu.memory_space<vmem>>, vector<1x1x16x16xbf16>,
    %35 = vector.extract_strided_slice %19 {offsets = [0, 48], sizes = [16, 16], strides = [1, 1]} : vector<16x64xf32> to vector<16x16xf32>
    %36 = arith.truncf %35 : vector<16x16xf32> to vector<16x16xbf16>
    %c0_19 = arith.constant 0 : index
    %c3 = arith.constant 3 : index
    %c0_20 = arith.constant 0 : index
    %c0_21 = arith.constant 0 : index
    %37 = vector.load %arg7[%c0_19, %c3, %c0_20, %c0_21] : memref<1x4x16x16xbf16, #tpu.memory_space<vmem>>, vector<1x1x16x16xbf16>
    %38 = vector.shape_cast %37 : vector<1x1x16x16xbf16> to vector<16x16xbf16>
    %39 = vector.shape_cast %36 : vector<16x16xbf16> to vector<1x1x16x16xbf16>
    tpu.vector_store %arg7[%c0_19, %c3, %c0_20, %c0_21], %39 {strides = array<i32>} : memref<1x4x16x16xbf16, #tpu.memory_space<vmem>>, vector<1x1x16x16xbf16>,
    %c0_22 = arith.constant 0 : index
    %c0_23 = arith.constant 0 : index
    %40 = vector.load %arg5[%c0_22, %c0_23] : memref<32x16xbf16, #tpu.memory_space<vmem>>, vector<32x16xbf16>
    %cst_24 = arith.constant dense<0.000000e+00> : vector<16x16xf32>
    %41 = tpu.matmul %17, %40, %cst_24 {dimension_numbers = #tpu.dot_dimension_numbers<[1], [0], [0], [1], [0, 0, 1, 1], [], []>} : vector<16x32xbf16>, vector<32x16xbf16>, vector<16x16xf32> -> vector<16x16xf32>
    %42 = arith.truncf %41 : vector<16x16xf32> to vector<16x16xbf16>
    %c0_25 = arith.constant 0 : index
    %c0_26 = arith.constant 0 : index
    %c0_27 = arith.constant 0 : index
    %43 = vector.load %arg8[%c0_25, %c0_26, %c0_27] : memref<1x16x16xbf16, #tpu.memory_space<vmem>>, vector<1x16x16xbf16>
    %44 = vector.shape_cast %43 : vector<1x16x16xbf16> to vector<16x16xbf16>
    %45 = vector.shape_cast %42 : vector<16x16xbf16> to vector<1x16x16xbf16>
    tpu.vector_store %arg8[%c0_25, %c0_26, %c0_27], %45 {strides = array<i32>} : memref<1x16x16xbf16, #tpu.memory_space<vmem>>, vector<1x16x16xbf16>,
    %c0_28 = arith.constant 0 : index
    %c0_29 = arith.constant 0 : index
    %46 = vector.load %arg6[%c0_28, %c0_29] : memref<32x16xbf16, #tpu.memory_space<vmem>>, vector<32x16xbf16>
    %cst_30 = arith.constant dense<0.000000e+00> : vector<16x16xf32>
    %47 = tpu.matmul %17, %46, %cst_30 {dimension_numbers = #tpu.dot_dimension_numbers<[1], [0], [0], [1], [0, 0, 1, 1], [], []>} : vector<16x32xbf16>, vector<32x16xbf16>, vector<16x16xf32> -> vector<16x16xf32>
    %48 = arith.truncf %47 : vector<16x16xf32> to vector<16x16xbf16>
    %c0_31 = arith.constant 0 : index
    %c0_32 = arith.constant 0 : index
    %c0_33 = arith.constant 0 : index
    %49 = vector.load %arg9[%c0_31, %c0_32, %c0_33] : memref<1x16x16xbf16, #tpu.memory_space<vmem>>, vector<1x16x16xbf16>
    %50 = vector.shape_cast %49 : vector<1x16x16xbf16> to vector<16x16xbf16>
    %51 = vector.shape_cast %48 : vector<16x16xbf16> to vector<1x16x16xbf16>
    tpu.vector_store %arg9[%c0_31, %c0_32, %c0_33], %51 {strides = array<i32>} : memref<1x16x16xbf16, #tpu.memory_space<vmem>>, vector<1x16x16xbf16>,
    return
  }
  func.func @transform_0(%arg0: i32, %arg1: i32) -> (i32, i32, i32) {
    %c0_i32 = arith.constant 0 : i32
    %c0_i32_0 = arith.constant 0 : i32
    return %arg0, %arg1, %c0_i32 : i32, i32, i32
  }
  func.func @transform_1(%arg0: i32, %arg1: i32) -> (i32, i32) {
    %c0_i32 = arith.constant 0 : i32
    %c0_i32_0 = arith.constant 0 : i32
    %c0_i32_1 = arith.constant 0 : i32
    return %c0_i32, %c0_i32_0 : i32, i32
  }
  func.func @transform_2(%arg0: i32, %arg1: i32) -> (i32, i32) {
    %c0_i32 = arith.constant 0 : i32
    %c0_i32_0 = arith.constant 0 : i32
    %c0_i32_1 = arith.constant 0 : i32
    return %c0_i32, %c0_i32_0 : i32, i32
  }
  func.func @transform_3(%arg0: i32, %arg1: i32) -> (i32, i32) {
    %c0_i32 = arith.constant 0 : i32
    %c0_i32_0 = arith.constant 0 : i32
    %c0_i32_1 = arith.constant 0 : i32
    return %c0_i32, %c0_i32_0 : i32, i32
  }
  func.func @transform_4(%arg0: i32, %arg1: i32) -> (i32, i32) {
    %c0_i32 = arith.constant 0 : i32
    %c0_i32_0 = arith.constant 0 : i32
    %c0_i32_1 = arith.constant 0 : i32
    return %c0_i32, %c0_i32_0 : i32, i32
  }
  func.func @transform_5(%arg0: i32, %arg1: i32) -> (i32, i32, i32, i32) {
    %c0_i32 = arith.constant 0 : i32
    %c0_i32_0 = arith.constant 0 : i32
    %c0_i32_1 = arith.constant 0 : i32
    return %arg0, %c0_i32, %arg1, %c0_i32_0 : i32, i32, i32, i32
  }
  func.func @transform_6(%arg0: i32, %arg1: i32) -> (i32, i32, i32) {
    %c0_i32 = arith.constant 0 : i32
    %c0_i32_0 = arith.constant 0 : i32
    return %arg0, %arg1, %c0_i32 : i32, i32, i32
  }
  func.func @transform_7(%arg0: i32, %arg1: i32) -> (i32, i32, i32) {
    %c0_i32 = arith.constant 0 : i32
    %c0_i32_0 = arith.constant 0 : i32
    return %arg0, %arg1, %c0_i32 : i32, i32, i32
  }
}

</mosaic_0001>

<llo_original>
// kernel: tpu_custom_call.1
$region0: #{tpu_custom_call.1}
  #allocation0 [shape = 'u32[]', space=smem, size = 0x4, offset = 0x4, fixed_abs, tag = 'smem constant byte address 0x4 - core index']
  #allocation1 [shape = 'u32[144,128]{1,0:T(1,128)}', space=vmem, size = 0x12000, scoped, tag = 'internal scratch']
  %s0 = inlined_call_operand.vmem [shape: bf16[2,16,32], index: 0, kind: input, shape index: {}]
  %s1 = inlined_call_operand.vmem [shape: f32[1,32], index: 1, kind: input, shape index: {}]
  %s2 = inlined_call_operand.vmem [shape: bf16[32,64], index: 2, kind: input, shape index: {}]
  %s3 = inlined_call_operand.vmem [shape: bf16[32,16], index: 3, kind: input, shape index: {}]
  %s4 = inlined_call_operand.vmem [shape: bf16[32,16], index: 4, kind: input, shape index: {}]
  %s5 = inlined_call_operand.hbm [shape: bf16[2,4,16,16], index: 5, kind: output, shape index: {0}]
  %s6 = inlined_call_operand.hbm [shape: bf16[2,16,16], index: 6, kind: output, shape index: {1}]
  %s7 = inlined_call_operand.hbm [shape: bf16[2,16,16], index: 7, kind: output, shape index: {2}]
  %8 = xla_tuple %s5, %s6, %s7
  %s9 = sld [smem:[#allocation0]]
  $region69: #{tpu_custom_call.1} parent=0
    _
  %s11 = ssub.s32 1, %s9
  %s12 = scalar_select 0, %s11, %s9
  $region1: #{tpu_custom_call.1} parent=0
    #allocation2 [shape = 'u8[32768]{0}', space=vmem, size = 0x8000, scoped, tag = 'output window, operand 0']
    #allocation3 [shape = 's32[2]{0}', space=sflag, size = 0x8, scoped, tag = 'scoped memory for tpu_custom_call.1']
    #allocation4 [shape = 'u8[8192]{0}', space=vmem, size = 0x2000, scoped, tag = 'output window, operand 1']
    #allocation5 [shape = 's32[2]{0}', space=sflag, size = 0x8, scoped, tag = 'scoped memory for tpu_custom_call.1']
    #allocation6 [shape = 'u8[8192]{0}', space=vmem, size = 0x2000, scoped, tag = 'output window, operand 2']
    %13 = vsyncpa [#allocation3], 0
    %s14 = scalar_lea.sflag [#allocation3], 1
    %15 = vsyncpa %s14, 0
    %16 = vsyncpa [#allocation5], 0
    %s17 = scalar_lea.sflag [#allocation5], 1
    %18 = vsyncpa %s17, 0
    loop: start=0, step=1, limit=4
    $region2: #{tpu_custom_call.1} parent=1 // loop_pre_header
      _
    $region3: #{tpu_custom_call.1} parent=1 // loop_header
      %s20 = sphi 0, %s24
      %p21 = scmp.ge.s32.totalorder %s20, 4
      %s27 = sphi 0, %s39
      %s28 = sphi 0, %s35
      %s29 = sphi 0, %s27
      %s30 = sphi 0, %s28
      %s31 = sphi 0, %s29
      %s32 = sphi 0, %s30
      %s44 = sphi 0, %s46
      %s47 = sphi 0, %s44
      %s48 = sphi 0, %s47
      %s64 = sphi 0, %s48
      %s68 = sphi 0, %s68
      %s70 = sphi 0, %s68
      %s71 = sphi 0, %s70
      %s85 = sphi 0, %s71
      %s89 = sphi 0, %s89
      %s91 = sphi 0, %s89
      %s92 = sphi 0, %s91
      %s106 = sphi 0, %s92
      %s110 = sphi 0, %s110
      %s112 = sphi 0, %s110
      %s113 = sphi 0, %s112
      %s127 = sphi 0, %s113
      %s131 = sphi 0, %s131
      %s133 = sphi 0, %s131
      %s134 = sphi 0, %s133
      %s148 = sphi 0, %s134
      %s156 = sphi 0, %s158
      %s159 = sphi 0, %s156
      %s160 = sphi 0, %s159
      %s176 = sphi 0, %s160
      %s184 = sphi 0, %s186
      %s187 = sphi 0, %s184
      %s188 = sphi 0, %s187
      %s204 = sphi 0, %s188
      %s212 = sphi 0, %s214
      %s215 = sphi 0, %s212
      %s216 = sphi 0, %s215
      %s232 = sphi 0, %s216
    $region4: #{tpu_custom_call.1} parent=1 // loop_header_branch
      %23 = sbr.rel (%p21) target = $region8
    $region5: #{tpu_custom_call.1} parent=1 // loop_body
      %s25 = ssub.s32 %s20, 1
      %s26 = ssub.s32 %s20, 2
      %s33 = sadd.s32 1, %s28
      %p34 = scmp.ge.s32.totalorder %s33, 1
      %s35 = scalar_select %p34, 0, %s33
      %s36 = sadd.s32 1, %s27
      %s37 = scalar_select %p34, %s36, %s27
      %p38 = scmp.ge.s32.totalorder %s37, 2
      %s39 = scalar_select %p38, 0, %s37
      %s40 = ssub.s32 %s27, %s39
      %s41 = ssub.s32 %s28, %s35
      %s42 = sor.u32 %s40, %s41
      %p43 = scmp.eq.s32.totalorder %s42, 0
      %s45 = sadd.s32 %s44, 1
      %s46 = scalar_select %p43, %s44, %s45
      %p49 = pneg %p43
      %p50 = scmp.eq.s32.totalorder %s20, 1
      %p51 = por %p49, %p50
      %p52 = scmp.ne.s32.totalorder %s44, %s47
      %p53 = scmp.eq.s32.totalorder %s20, 0
      %p54 = por %p52, %p53
      %p55 = scmp.ne.s32.totalorder %s44, %s47
      %p56 = scmp.eq.s32.totalorder %s25, 1
      %p57 = por %p55, %p56
      %p58 = scmp.ne.s32.totalorder %s47, %s48
      %p59 = scmp.eq.s32.totalorder %s25, 0
      %p60 = por %p58, %p59
      %p61 = scmp.ne.s32.totalorder %s47, %s48
      %p62 = scmp.eq.s32.totalorder %s26, 1
      %p63 = por %p61, %p62
      %p65 = scmp.ne.s32.totalorder %s48, %s64
      %p66 = scmp.eq.s32.totalorder %s26, 0
      %p67 = por %p65, %p66
      %s69 = sadd.s32 %s68, 1
      %p72 = scmp.eq.s32.totalorder %s20, 1
      %p73 = scmp.ne.s32.totalorder %s68, %s70
      %p74 = scmp.eq.s32.totalorder %s20, 0
      %p75 = por %p73, %p74
      %p76 = scmp.ne.s32.totalorder %s68, %s70
      %p77 = scmp.eq.s32.totalorder %s25, 1
      %p78 = por %p76, %p77
      %p79 = scmp.ne.s32.totalorder %s70, %s71
      %p80 = scmp.eq.s32.totalorder %s25, 0
      %p81 = por %p79, %p80
      %p82 = scmp.ne.s32.totalorder %s70, %s71
      %p83 = scmp.eq.s32.totalorder %s26, 1
      %p84 = por %p82, %p83
      %p86 = scmp.ne.s32.totalorder %s71, %s85
      %p87 = scmp.eq.s32.totalorder %s26, 0
      %p88 = por %p86, %p87
      %s90 = sadd.s32 %s89, 1
      %p93 = scmp.eq.s32.totalorder %s20, 1
      %p94 = scmp.ne.s32.totalorder %s89, %s91
      %p95 = scmp.eq.s32.totalorder %s20, 0
      %p96 = por %p94, %p95
      %p97 = scmp.ne.s32.totalorder %s89, %s91
      %p98 = scmp.eq.s32.totalorder %s25, 1
      %p99 = por %p97, %p98
      %p100 = scmp.ne.s32.totalorder %s91, %s92
      %p101 = scmp.eq.s32.totalorder %s25, 0
      %p102 = por %p100, %p101
      %p103 = scmp.ne.s32.totalorder %s91, %s92
      %p104 = scmp.eq.s32.totalorder %s26, 1
      %p105 = por %p103, %p104
      %p107 = scmp.ne.s32.totalorder %s92, %s106
      %p108 = scmp.eq.s32.totalorder %s26, 0
      %p109 = por %p107, %p108
      %s111 = sadd.s32 %s110, 1
      %p114 = scmp.eq.s32.totalorder %s20, 1
      %p115 = scmp.ne.s32.totalorder %s110, %s112
      %p116 = scmp.eq.s32.totalorder %s20, 0
      %p117 = por %p115, %p116
      %p118 = scmp.ne.s32.totalorder %s110, %s112
      %p119 = scmp.eq.s32.totalorder %s25, 1
      %p120 = por %p118, %p119
      %p121 = scmp.ne.s32.totalorder %s112, %s113
      %p122 = scmp.eq.s32.totalorder %s25, 0
      %p123 = por %p121, %p122
      %p124 = scmp.ne.s32.totalorder %s112, %s113
      %p125 = scmp.eq.s32.totalorder %s26, 1
      %p126 = por %p124, %p125
      %p128 = scmp.ne.s32.totalorder %s113, %s127
      %p129 = scmp.eq.s32.totalorder %s26, 0
      %p130 = por %p128, %p129
      %s132 = sadd.s32 %s131, 1
      %p135 = scmp.eq.s32.totalorder %s20, 1
      %p136 = scmp.ne.s32.totalorder %s131, %s133
      %p137 = scmp.eq.s32.totalorder %s20, 0
      %p138 = por %p136, %p137
      %p139 = scmp.ne.s32.totalorder %s131, %s133
      %p140 = scmp.eq.s32.totalorder %s25, 1
      %p141 = por %p139, %p140
      %p142 = scmp.ne.s32.totalorder %s133, %s134
      %p143 = scmp.eq.s32.totalorder %s25, 0
      %p144 = por %p142, %p143
      %p145 = scmp.ne.s32.totalorder %s133, %s134
      %p146 = scmp.eq.s32.totalorder %s26, 1
      %p147 = por %p145, %p146
      %p149 = scmp.ne.s32.totalorder %s134, %s148
      %p150 = scmp.eq.s32.totalorder %s26, 0
      %p151 = por %p149, %p150
      %s152 = ssub.s32 %s27, %s39
      %s153 = ssub.s32 %s28, %s35
      %s154 = sor.u32 %s152, %s153
      %p155 = scmp.eq.s32.totalorder %s154, 0
      %s157 = sadd.s32 %s156, 1
      %s158 = scalar_select %p155, %s156, %s157
      %p161 = pneg %p155
      %p162 = scmp.eq.s32.totalorder %s20, 1
      %p163 = por %p161, %p162
      %p164 = scmp.ne.s32.totalorder %s156, %s159
      %p165 = scmp.eq.s32.totalorder %s20, 0
      %p166 = por %p164, %p165
      %p167 = scmp.ne.s32.totalorder %s156, %s159
      %p168 = scmp.eq.s32.totalorder %s25, 1
      %p169 = por %p167, %p168
      %p170 = scmp.ne.s32.totalorder %s159, %s160
      %p171 = scmp.eq.s32.totalorder %s25, 0
      %p172 = por %p170, %p171
      %p173 = scmp.ne.s32.totalorder %s159, %s160
      %p174 = scmp.eq.s32.totalorder %s26, 1
      %p175 = por %p173, %p174
      %p177 = scmp.ne.s32.totalorder %s160, %s176
      %p178 = scmp.eq.s32.totalorder %s26, 0
      %p179 = por %p177, %p178
      %s180 = ssub.s32 %s27, %s39
      %s181 = ssub.s32 %s28, %s35
      %s182 = sor.u32 %s180, %s181
      %p183 = scmp.eq.s32.totalorder %s182, 0
      %s185 = sadd.s32 %s184, 1
      %s186 = scalar_select %p183, %s184, %s185
      %p189 = pneg %p183
      %p190 = scmp.eq.s32.totalorder %s20, 1
      %p191 = por %p189, %p190
      %p192 = scmp.ne.s32.totalorder %s184, %s187
      %p193 = scmp.eq.s32.totalorder %s20, 0
      %p194 = por %p192, %p193
      %p195 = scmp.ne.s32.totalorder %s184, %s187
      %p196 = scmp.eq.s32.totalorder %s25, 1
      %p197 = por %p195, %p196
      %p198 = scmp.ne.s32.totalorder %s187, %s188
      %p199 = scmp.eq.s32.totalorder %s25, 0
      %p200 = por %p198, %p199
      %p201 = scmp.ne.s32.totalorder %s187, %s188
      %p202 = scmp.eq.s32.totalorder %s26, 1
      %p203 = por %p201, %p202
      %p205 = scmp.ne.s32.totalorder %s188, %s204
      %p206 = scmp.eq.s32.totalorder %s26, 0
      %p207 = por %p205, %p206
      %s208 = ssub.s32 %s27, %s39
      %s209 = ssub.s32 %s28, %s35
      %s210 = sor.u32 %s208, %s209
      %p211 = scmp.eq.s32.totalorder %s210, 0
      %s213 = sadd.s32 %s212, 1
      %s214 = scalar_select %p211, %s212, %s213
      %p217 = pneg %p211
      %p218 = scmp.eq.s32.totalorder %s20, 1
      %p219 = por %p217, %p218
      %p220 = scmp.ne.s32.totalorder %s212, %s215
      %p221 = scmp.eq.s32.totalorder %s20, 0
      %p222 = por %p220, %p221
      %p223 = scmp.ne.s32.totalorder %s212, %s215
      %p224 = scmp.eq.s32.totalorder %s25, 1
      %p225 = por %p223, %p224
      %p226 = scmp.ne.s32.totalorder %s215, %s216
      %p227 = scmp.eq.s32.totalorder %s25, 0
      %p228 = por %p226, %p227
      %p229 = scmp.ne.s32.totalorder %s215, %s216
      %p230 = scmp.eq.s32.totalorder %s26, 1
      %p231 = por %p229, %p230
      %p233 = scmp.ne.s32.totalorder %s216, %s232
      %p234 = scmp.eq.s32.totalorder %s26, 0
      %p235 = por %p233, %p234
      %p236 = scmp.le.s32.totalorder 1, %s20
      %p237 = scmp.lt.s32.totalorder %s20, 3
      %p238 = pnand %p236, %p237
      %p239 = pneg %p238
      // Predicated region
      $region9: #{tpu_custom_call.1} parent=5 // pred_check
        _
      $region10: #{tpu_custom_call.1} parent=5 // pred_check_branch
        %241 = sbr.rel (%p238) target = $region12
      $region11: #{tpu_custom_call.1} parent=5 // pred_region
        %s242 = ssub.s32 %s20, 1
        // Predicated region
        $region13: #{tpu_custom_call.1} parent=11 // pred_check
          %p243 = pneg %p81
        $region14: #{tpu_custom_call.1} parent=11 // pred_check_branch
          %245 = sbr.rel (%p243) target = $region16
        $region15: #{tpu_custom_call.1} parent=11 // pred_region
          _
        $region16: #{tpu_custom_call.1} parent=11 // pred_fallthru
          _
        // Predicated region
        $region17: #{tpu_custom_call.1} parent=11 // pred_check
          %p246 = pneg %p102
        $region18: #{tpu_custom_call.1} parent=11 // pred_check_branch
          %248 = sbr.rel (%p246) target = $region20
        $region19: #{tpu_custom_call.1} parent=11 // pred_region
          _
        $region20: #{tpu_custom_call.1} parent=11 // pred_fallthru
          _
        // Predicated region
        $region21: #{tpu_custom_call.1} parent=11 // pred_check
          %p249 = pneg %p123
        $region22: #{tpu_custom_call.1} parent=11 // pred_check_branch
          %251 = sbr.rel (%p249) target = $region24
        $region23: #{tpu_custom_call.1} parent=11 // pred_region
          _
        $region24: #{tpu_custom_call.1} parent=11 // pred_fallthru
          _
        // Predicated region
        $region25: #{tpu_custom_call.1} parent=11 // pred_check
          %p252 = pneg %p144
        $region26: #{tpu_custom_call.1} parent=11 // pred_check_branch
          %254 = sbr.rel (%p252) target = $region28
        $region27: #{tpu_custom_call.1} parent=11 // pred_region
          _
        $region28: #{tpu_custom_call.1} parent=11 // pred_fallthru
          _
      $region12: #{tpu_custom_call.1} parent=5 // pred_fallthru
        _
      %p255 = scmp.lt.s32.totalorder %s20, 2
      // Predicated region
      $region29: #{tpu_custom_call.1} parent=5 // pred_check
        %p256 = pneg %p255
      $region30: #{tpu_custom_call.1} parent=5 // pred_check_branch
        %258 = sbr.rel (%p256) target = $region32
      $region31: #{tpu_custom_call.1} parent=5 // pred_region
        // Predicated region
        $region33: #{tpu_custom_call.1} parent=31 // pred_check
          %p259 = pneg %p54
        $region34: #{tpu_custom_call.1} parent=31 // pred_check_branch
          %261 = sbr.rel (%p259) target = $region36
        $region35: #{tpu_custom_call.1} parent=31 // pred_region
          %s262 = smul.u32 2, %s28
          %p263 = scmp.lt.s32.totalorder %s27, 1
          %s264 = scalar_select %p263, %s27, 1
          %p265 = scmp.lt.s32.totalorder %s262, 1
          %s266 = scalar_select %p265, %s262, 1
          %s267 = smul.addr %s264, 2
          %s268 = sadd.s32 %s266, %s267
          %s269 = smul.addr %s268, 4
          %s270 = scalar_lea.vmem %s0, %s269
          %s271 = smul.u32 2, %s28
        $region36: #{tpu_custom_call.1} parent=31 // pred_fallthru
          _
      $region32: #{tpu_custom_call.1} parent=5 // pred_fallthru
        _
      %p272 = scmp.le.s32.totalorder 1, %s20
      %p273 = scmp.lt.s32.totalorder %s20, 3
      %p274 = pnand %p272, %p273
      %p275 = pneg %p274
      // Predicated region
      $region37: #{tpu_custom_call.1} parent=5 // pred_check
        _
      $region38: #{tpu_custom_call.1} parent=5 // pred_check_branch
        %277 = sbr.rel (%p274) target = $region40
      $region39: #{tpu_custom_call.1} parent=5 // pred_region
        %s278 = ssub.s32 %s20, 1
        %s279 = smul.u32 2, %s30
        %p280 = scmp.lt.s32.totalorder %s29, 1
        %s281 = scalar_select %p280, %s29, 1
        %p282 = scmp.lt.s32.totalorder %s279, 1
        %s283 = scalar_select %p282, %s279, 1
        %s284 = smul.addr %s281, 2
        %s285 = sadd.s32 %s283, %s284
        %s286 = smul.addr %s285, 4
        %s287 = scalar_lea.vmem %s0, %s286
        %p288 = pneg %p60
        %p289 = pneg %p57
        %p290 = pneg %p81
        %p291 = pneg %p78
        %p292 = pneg %p102
        %p293 = pneg %p99
        %p294 = pneg %p123
        %p295 = pneg %p120
        %p296 = pneg %p144
        %p297 = pneg %p141
        %p298 = pneg %p172
        %p299 = pneg %p169
        %s300 = sand.u32 %s159, 1
        %s301 = scalar_lea.sflag [#allocation3], %s300
        %s302 = sand.u32 %s159, 1
        %s303 = smul.addr %s302, 32
        %s304 = scalar_lea.vmem [#allocation2], %s303
        %p305 = pneg %p200
        %p306 = pneg %p197
        %s307 = sand.u32 %s25, 1
        %s308 = scalar_lea.sflag [#allocation5], %s307
        %s309 = sand.u32 %s187, 1
        %s310 = smul.addr %s309, 8
        %s311 = scalar_lea.vmem [#allocation4], %s310
        %p312 = pneg %p228
        %p313 = pneg %p225
        %s314 = sand.u32 %s25, 1
        %s315 = scalar_lea.sflag [#allocation5], %s314
        %s316 = sand.u32 %s215, 1
        %s317 = smul.addr %s316, 8
        %s318 = scalar_lea.vmem [#allocation6], %s317
        %s319 = smul.u32 2, %s30
        %p320 = scmp.lt.s32.totalorder %s29, 1
        %s321 = scalar_select %p320, %s29, 1
        %p322 = scmp.lt.s32.totalorder %s319, 1
        %s323 = scalar_select %p322, %s319, 1
        %s324 = smul.addr %s321, 2
        %s325 = sadd.s32 %s323, %s324
        %s326 = smul.addr %s325, 4
        %s327 = scalar_lea.vmem %s0, %s326
        %s328 = smul.u32 2, %s30
        %s329 = smul.u32 2, %s30
        %s330 = smul.u32 2, %s30
        %s331 = smul.u32 2, %s30
        %v333 = vld [vmem:[%s327] sm:$0xf]
        %v334 = vld [vmem:[%s327 + $0x4] sm:$0xf]
        %v335 = vunpack.c.l.bf16 %v333
        %v336 = vunpack.c.l.bf16 %v334
        %v337 = vld [vmem:[%s1] sm:$0x1]
        %v338 = vmul.f32 %v335, %v335
        %v339 = vmul.f32 %v336, %v336
        %vm340 = vcmask 261120
        %v341 = vsel %vm340, %v338, 0.0
        %342 = vadd.xlane.f32.xlu0 %v341
        %v343 = vpop.xlane.xlu0 %342
        %v344 = vsel %vm340, %v339, 0.0
        %345 = vadd.xlane.f32.xlu0 %v344
        %v346 = vpop.xlane.xlu0 %345
        %v347 = vrsqrt.pop %v343
        %v348 = vmul.f32 %v343, %v347
        %vm349 = vcmp.eq.f32.partialorder %v343, inf
        %v350 = vsel %vm349, %v343, %v348
        %vm351 = vcmp.eq.f32.partialorder %v343, 0.0
        %v352 = vand.u32 %v343, 2147483648
        %v353 = vsel %vm351, %v352, %v350
        %v354 = vrsqrt.pop %v346
        %v355 = vmul.f32 %v346, %v354
        %vm356 = vcmp.eq.f32.partialorder %v346, inf
        %v357 = vsel %vm356, %v346, %v355
        %vm358 = vcmp.eq.f32.partialorder %v346, 0.0
        %v359 = vand.u32 %v346, 2147483648
        %v360 = vsel %vm358, %v359, %v357
        %v361 = vmul.f32 %v353, 0.17677669
        %v362 = vmul.f32 %v360, 0.17677669
        %v363 = vmax.f32 %v361, 1e-08
        %v364 = vmax.f32 %v362, 1e-08
        %v365 = vrcp.pop %v363
        %v366 = vrcp.pop %v364
        %v367 = vmul.f32 %v335, %v365
        %v368 = vmul.f32 %v336, %v366
        %v370 = vlaneseq
        %v371 = vshrl.u32 %v370, 7
        %v372 = vsub.s32 0, %v371
        %v373 = vrot.slane %v337, %v372
        %v375 = vmul.f32 %v367, %v373
        %v376 = vmul.f32 %v368, %v373
        %v377 = vpack.c.bf16 %v376, %v375
        %v378 = vld [vmem:[%s2] sm:$0xf]
        %v379 = vld [vmem:[%s2 + $0x4] sm:$0xf]
        %v380 = vld [vmem:[%s2 + $0x8] sm:$0xf]
        %v381 = vld [vmem:[%s2 + $0xc] sm:$0xf]
        %v386 = vunpack.c.l.b16 %v378
        %v387 = vunpack.c.l.b16 %v379
        %v388 = vunpack.c.l.b16 %v380
        %v389 = vunpack.c.l.b16 %v381
        %v390 = vpack.c.b16 %v387, %v386
        %v391 = vpack.c.b16 %v389, %v388
        %v395 = vsel %vm340, %v377, 0
        %397 = vmatprep.subr.bf16.mxu0 0
        %398 = vmatpush1.bf16.msra.mxu0 %v390
        %399 = vmatprep.subr.bf16.mxu0 0
        %400 = vmatpush1.bf16.msra.mxu0 %v391
        %401 = vmatprep.subr.bf16.mxu0 0
        %402 = vmatpush1.bf16.msra.mxu0 0
        %403 = vmatprep.subr.bf16.mxu0 0
        %404 = vmatpush1.bf16.msra.mxu0 0
        %405 = vmatprep.subr.bf16.mxu0 0
        %406 = vmatpush1.bf16.msra.mxu0 0
        %407 = vmatprep.subr.bf16.mxu0 0
        %408 = vmatpush1.bf16.msra.mxu0 0
        %409 = vmatprep.subr.bf16.mxu0 0
        %410 = vmatpush1.bf16.msra.mxu0 0
        %411 = vmatprep.subr.bf16.mxu0 0
        %412 = vmatpush1.bf16.msra.mxu0 0
        %413 = vmatprep.subr.bf16.mxu0 0
        %414 = vmatpush1.bf16.msra.mxu0 0
        %415 = vmatprep.subr.bf16.mxu0 0
        %416 = vmatpush1.bf16.msra.mxu0 0
        %417 = vmatprep.subr.bf16.mxu0 0
        %418 = vmatpush1.bf16.msra.mxu0 0
        %419 = vmatprep.subr.bf16.mxu0 0
        %420 = vmatpush1.bf16.msra.mxu0 0
        %421 = vmatprep.subr.bf16.mxu0 0
        %422 = vmatpush1.bf16.msra.mxu0 0
        %423 = vmatprep.subr.bf16.mxu0 0
        %424 = vmatpush1.bf16.msra.mxu0 0
        %425 = vmatprep.subr.bf16.mxu0 0
        %426 = vmatpush1.bf16.msra.mxu0 0
        %427 = vmatprep.subr.bf16.mxu0 0
        %428 = vmatpush1.bf16.msra.mxu0 0
        %429 = vmatprep.mubr.bf16.mxu0 0
        %430 = vmatmul.mubr.bf16.gmra.mrb[0].mxu0 %v395
        %v431 = vpop.f32.mrb[0].mxu0
        %v432 = vadd.f32 0.0, %v431
        %v433 = vpop.f32.mrb[0].mxu0
        %v434 = vpop.f32.mrb[0].mxu0
        %v435 = vadd.f32 0.0, %v434
        %v436 = vpop.f32.mrb[0].mxu0
        %437 = vdwg.mxu0
        %v438 = vpack.c.bf16 %v435, %v432
        %v440 = vunpack.c.l.b16 %v438
        %v441 = vunpack.c.h.b16 %v438
        %v442 = vpack.c.b16 %v440, %v440
        %v443 = vpack.c.b16 %v441, %v441
        %vm446 = vcmask 125952
        %447 = vst.msk [vmem:[%s304] sm:$0xf] %vm446, %v442
        %448 = vst.msk [vmem:[%s304 + $0x4] sm:$0xf] %vm446, %v443
        %449 = vrot.lane.b32.xlu0 %v442, 112
        %v450 = vpop.permute.xlu0 %449
        %451 = vrot.lane.b32.xlu0 %v443, 112
        %v452 = vpop.permute.xlu0 %451
        %s455 = scalar_lea.vmem %s304, 8 [#allocation2]
        %456 = vst.msk [vmem:[%s455] sm:$0xf] %vm446, %v450
        %457 = vst.msk [vmem:[%s455 + $0x4] sm:$0xf] %vm446, %v452
        %458 = vrot.lane.b32.xlu0 %v442, 96
        %v459 = vpop.permute.xlu0 %458
        %460 = vrot.lane.b32.xlu0 %v443, 96
        %v461 = vpop.permute.xlu0 %460
        %s464 = scalar_lea.vmem %s304, 16 [#allocation2]
        %465 = vst.msk [vmem:[%s464] sm:$0xf] %vm446, %v459
        %466 = vst.msk [vmem:[%s464 + $0x4] sm:$0xf] %vm446, %v461
        %467 = vrot.lane.b32.xlu0 %v442, 80
        %v468 = vpop.permute.xlu0 %467
        %469 = vrot.lane.b32.xlu0 %v443, 80
        %v470 = vpop.permute.xlu0 %469
        %s473 = scalar_lea.vmem %s304, 24 [#allocation2]
        %474 = vst.msk [vmem:[%s473] sm:$0xf] %vm446, %v468
        %475 = vst.msk [vmem:[%s473 + $0x4] sm:$0xf] %vm446, %v470
        %v476 = vld [vmem:[%s3] sm:$0xf]
        %v477 = vld [vmem:[%s3 + $0x4] sm:$0xf]
        %v478 = vld [vmem:[%s3 + $0x8] sm:$0xf]
        %v479 = vld [vmem:[%s3 + $0xc] sm:$0xf]
        %v484 = vunpack.c.l.b16 %v476
        %v485 = vunpack.c.l.b16 %v477
        %v486 = vunpack.c.l.b16 %v478
        %v487 = vunpack.c.l.b16 %v479
        %v488 = vpack.c.b16 %v485, %v484
        %v489 = vpack.c.b16 %v487, %v486
        %492 = vmatprep.subr.bf16.mxu0 0
        %493 = vmatpush1.bf16.msra.mxu0 %v488
        %494 = vmatprep.subr.bf16.mxu0 0
        %495 = vmatpush1.bf16.msra.mxu0 %v489
        %496 = vmatprep.subr.bf16.mxu0 0
        %497 = vmatpush1.bf16.msra.mxu0 0
        %498 = vmatprep.subr.bf16.mxu0 0
        %499 = vmatpush1.bf16.msra.mxu0 0
        %500 = vmatprep.subr.bf16.mxu0 0
        %501 = vmatpush1.bf16.msra.mxu0 0
        %502 = vmatprep.subr.bf16.mxu0 0
        %503 = vmatpush1.bf16.msra.mxu0 0
        %504 = vmatprep.subr.bf16.mxu0 0
        %505 = vmatpush1.bf16.msra.mxu0 0
        %506 = vmatprep.subr.bf16.mxu0 0
        %507 = vmatpush1.bf16.msra.mxu0 0
        %508 = vmatprep.subr.bf16.mxu0 0
        %509 = vmatpush1.bf16.msra.mxu0 0
        %510 = vmatprep.subr.bf16.mxu0 0
        %511 = vmatpush1.bf16.msra.mxu0 0
        %512 = vmatprep.subr.bf16.mxu0 0
        %513 = vmatpush1.bf16.msra.mxu0 0
        %514 = vmatprep.subr.bf16.mxu0 0
        %515 = vmatpush1.bf16.msra.mxu0 0
        %516 = vmatprep.subr.bf16.mxu0 0
        %517 = vmatpush1.bf16.msra.mxu0 0
        %518 = vmatprep.subr.bf16.mxu0 0
        %519 = vmatpush1.bf16.msra.mxu0 0
        %520 = vmatprep.subr.bf16.mxu0 0
        %521 = vmatpush1.bf16.msra.mxu0 0
        %522 = vmatprep.subr.bf16.mxu0 0
        %523 = vmatpush1.bf16.msra.mxu0 0
        %524 = vmatprep.mubr.bf16.mxu0 0
        %525 = vmatmul.mubr.bf16.gmra.mrb[0].mxu0 %v395
        %v526 = vpop.f32.mrb[0].mxu0
        %v527 = vadd.f32 0.0, %v526
        %v528 = vpop.f32.mrb[0].mxu0
        %v529 = vpop.f32.mrb[0].mxu0
        %v530 = vadd.f32 0.0, %v529
        %v531 = vpop.f32.mrb[0].mxu0
        %532 = vdwg.mxu0
        %v533 = vpack.c.bf16 %v530, %v527
        %v535 = vunpack.c.l.b16 %v533
        %v536 = vunpack.c.h.b16 %v533
        %v537 = vpack.c.b16 %v535, %v535
        %v538 = vpack.c.b16 %v536, %v536
        %541 = vst.msk [vmem:[%s311] sm:$0xf] %vm446, %v537
        %542 = vst.msk [vmem:[%s311 + $0x4] sm:$0xf] %vm446, %v538
        %v543 = vld [vmem:[%s4] sm:$0xf]
        %v544 = vld [vmem:[%s4 + $0x4] sm:$0xf]
        %v545 = vld [vmem:[%s4 + $0x8] sm:$0xf]
        %v546 = vld [vmem:[%s4 + $0xc] sm:$0xf]
        %v551 = vunpack.c.l.b16 %v543
        %v552 = vunpack.c.l.b16 %v544
        %v553 = vunpack.c.l.b16 %v545
        %v554 = vunpack.c.l.b16 %v546
        %v555 = vpack.c.b16 %v552, %v551
        %v556 = vpack.c.b16 %v554, %v553
        %559 = vmatprep.subr.bf16.mxu0 0
        %560 = vmatpush1.bf16.msra.mxu0 %v555
        %561 = vmatprep.subr.bf16.mxu0 0
        %562 = vmatpush1.bf16.msra.mxu0 %v556
        %563 = vmatprep.subr.bf16.mxu0 0
        %564 = vmatpush1.bf16.msra.mxu0 0
        %565 = vmatprep.subr.bf16.mxu0 0
        %566 = vmatpush1.bf16.msra.mxu0 0
        %567 = vmatprep.subr.bf16.mxu0 0
        %568 = vmatpush1.bf16.msra.mxu0 0
        %569 = vmatprep.subr.bf16.mxu0 0
        %570 = vmatpush1.bf16.msra.mxu0 0
        %571 = vmatprep.subr.bf16.mxu0 0
        %572 = vmatpush1.bf16.msra.mxu0 0
        %573 = vmatprep.subr.bf16.mxu0 0
        %574 = vmatpush1.bf16.msra.mxu0 0
        %575 = vmatprep.subr.bf16.mxu0 0
        %576 = vmatpush1.bf16.msra.mxu0 0
        %577 = vmatprep.subr.bf16.mxu0 0
        %578 = vmatpush1.bf16.msra.mxu0 0
        %579 = vmatprep.subr.bf16.mxu0 0
        %580 = vmatpush1.bf16.msra.mxu0 0
        %581 = vmatprep.subr.bf16.mxu0 0
        %582 = vmatpush1.bf16.msra.mxu0 0
        %583 = vmatprep.subr.bf16.mxu0 0
        %584 = vmatpush1.bf16.msra.mxu0 0
        %585 = vmatprep.subr.bf16.mxu0 0
        %586 = vmatpush1.bf16.msra.mxu0 0
        %587 = vmatprep.subr.bf16.mxu0 0
        %588 = vmatpush1.bf16.msra.mxu0 0
        %589 = vmatprep.subr.bf16.mxu0 0
        %590 = vmatpush1.bf16.msra.mxu0 0
        %591 = vmatprep.mubr.bf16.mxu0 0
        %592 = vmatmul.mubr.bf16.gmra.mrb[0].mxu0 %v395
        %v593 = vpop.f32.mrb[0].mxu0
        %v594 = vadd.f32 0.0, %v593
        %v595 = vpop.f32.mrb[0].mxu0
        %v596 = vpop.f32.mrb[0].mxu0
        %v597 = vadd.f32 0.0, %v596
        %v598 = vpop.f32.mrb[0].mxu0
        %599 = vdwg.mxu0
        %v600 = vpack.c.bf16 %v597, %v594
        %v602 = vunpack.c.l.b16 %v600
        %v603 = vunpack.c.h.b16 %v600
        %v604 = vpack.c.b16 %v602, %v602
        %v605 = vpack.c.b16 %v603, %v603
        %608 = vst.msk [vmem:[%s318] sm:$0xf] %vm446, %v604
        %609 = vst.msk [vmem:[%s318 + $0x4] sm:$0xf] %vm446, %v605
        %s610 = sand.u32 %s159, 1
        %s611 = scalar_lea.sflag [#allocation3], %s610
        %s612 = sand.u32 %s159, 1
        %s613 = smul.addr %s612, 32
        %s614 = scalar_lea.vmem [#allocation2], %s613
        %s615 = sand.u32 %s25, 1
        %s616 = scalar_lea.sflag [#allocation5], %s615
        %s617 = sand.u32 %s187, 1
        %s618 = smul.addr %s617, 8
        %s619 = scalar_lea.vmem [#allocation4], %s618
        %s620 = sand.u32 %s25, 1
        %s621 = scalar_lea.sflag [#allocation5], %s620
        %s622 = sand.u32 %s215, 1
        %s623 = smul.addr %s622, 8
        %s624 = scalar_lea.vmem [#allocation6], %s623
        // Predicated region
        $region41: #{tpu_custom_call.1} parent=39 // pred_check
          %p625 = pneg %p169
        $region42: #{tpu_custom_call.1} parent=39 // pred_check_branch
          %627 = sbr.rel (%p625) target = $region44
        $region43: #{tpu_custom_call.1} parent=39 // pred_region
          %s628 = smul.u32 2, %s30
          %s630 = ssub.s32 512, 512
          %631 = vsyncadd %s611, %s630
          %s632 = smul.addr %s29, 8
          %s633 = sadd.s32 %s628, %s632
          %s634 = smul.addr %s633, 64
          %s635 = scalar_lea.hbm %s5, %s634
          %s636 = sshll.u32 %s614, 4
          %s637 = int_to_ptr.vmem [resolvable:$true] %s636
          %642 = dma.vmem_to_hbm [thread:$0]  %s637, 512, %s635, %s611, 64, 64, 4
        $region44: #{tpu_custom_call.1} parent=39 // pred_fallthru
          _
        // Predicated region
        $region45: #{tpu_custom_call.1} parent=39 // pred_check
          %p643 = pneg %p197
        $region46: #{tpu_custom_call.1} parent=39 // pred_check_branch
          %645 = sbr.rel (%p643) target = $region48
        $region47: #{tpu_custom_call.1} parent=39 // pred_region
          %s646 = smul.u32 2, %s30
          %s648 = ssub.s32 128, 128
          %649 = vsyncadd %s616, %s648
          %s650 = smul.addr %s29, 2
          %s651 = sadd.s32 %s646, %s650
          %s652 = smul.addr %s651, 64
          %s653 = scalar_lea.hbm %s6, %s652
          %s654 = sshll.u32 %s619, 4
          %s655 = int_to_ptr.vmem [resolvable:$true] %s654
          %660 = dma.vmem_to_hbm [thread:$0]  %s655, 128, %s653, %s616, 64, 64, 4
        $region48: #{tpu_custom_call.1} parent=39 // pred_fallthru
          _
        // Predicated region
        $region49: #{tpu_custom_call.1} parent=39 // pred_check
          %p661 = pneg %p225
        $region50: #{tpu_custom_call.1} parent=39 // pred_check_branch
          %663 = sbr.rel (%p661) target = $region52
        $region51: #{tpu_custom_call.1} parent=39 // pred_region
          %s664 = smul.u32 2, %s30
          %s666 = ssub.s32 128, 128
          %667 = vsyncadd %s621, %s666
          %s668 = smul.addr %s29, 2
          %s669 = sadd.s32 %s664, %s668
          %s670 = smul.addr %s669, 64
          %s671 = scalar_lea.hbm %s7, %s670
          %s672 = sshll.u32 %s624, 4
          %s673 = int_to_ptr.vmem [resolvable:$true] %s672
          %678 = dma.vmem_to_hbm [thread:$0]  %s673, 128, %s671, %s621, 64, 64, 4
        $region52: #{tpu_custom_call.1} parent=39 // pred_fallthru
          _
      $region40: #{tpu_custom_call.1} parent=5 // pred_fallthru
        _
      %p679 = scmp.le.s32.totalorder 2, %s20
      // Predicated region
      $region53: #{tpu_custom_call.1} parent=5 // pred_check
        %p680 = pneg %p679
      $region54: #{tpu_custom_call.1} parent=5 // pred_check_branch
        %682 = sbr.rel (%p680) target = $region56
      $region55: #{tpu_custom_call.1} parent=5 // pred_region
        %s683 = ssub.s32 %s20, 2
        // Predicated region
        $region57: #{tpu_custom_call.1} parent=55 // pred_check
          %p684 = pneg %p175
        $region58: #{tpu_custom_call.1} parent=55 // pred_check_branch
          %686 = sbr.rel (%p684) target = $region60
        $region59: #{tpu_custom_call.1} parent=55 // pred_region
          %s687 = sand.u32 %s160, 1
          %s688 = scalar_lea.sflag [#allocation3], %s687
          %s689 = sand.u32 %s160, 1
          %s690 = smul.addr %s689, 32
          %s691 = scalar_lea.vmem [#allocation2], %s690
          %692 = dma.done %s688, 512
        $region60: #{tpu_custom_call.1} parent=55 // pred_fallthru
          _
        // Predicated region
        $region61: #{tpu_custom_call.1} parent=55 // pred_check
          %p693 = pneg %p203
        $region62: #{tpu_custom_call.1} parent=55 // pred_check_branch
          %695 = sbr.rel (%p693) target = $region64
        $region63: #{tpu_custom_call.1} parent=55 // pred_region
          %s696 = sand.u32 %s26, 1
          %s697 = scalar_lea.sflag [#allocation5], %s696
          %s698 = sand.u32 %s188, 1
          %s699 = smul.addr %s698, 8
          %s700 = scalar_lea.vmem [#allocation4], %s699
          %701 = dma.done %s697, 128
        $region64: #{tpu_custom_call.1} parent=55 // pred_fallthru
          _
        // Predicated region
        $region65: #{tpu_custom_call.1} parent=55 // pred_check
          %p702 = pneg %p231
        $region66: #{tpu_custom_call.1} parent=55 // pred_check_branch
          %704 = sbr.rel (%p702) target = $region68
        $region67: #{tpu_custom_call.1} parent=55 // pred_region
          %s705 = sand.u32 %s26, 1
          %s706 = scalar_lea.sflag [#allocation5], %s705
          %s707 = sand.u32 %s216, 1
          %s708 = smul.addr %s707, 8
          %s709 = scalar_lea.vmem [#allocation6], %s708
          %710 = dma.done %s706, 128
        $region68: #{tpu_custom_call.1} parent=55 // pred_fallthru
          _
      $region56: #{tpu_custom_call.1} parent=5 // pred_fallthru
        _
    $region6: #{tpu_custom_call.1} parent=1 // loop_footer
      %s24 = sadd.s32 1, %s20
    $region7: #{tpu_custom_call.1} parent=1 // loop_footer_branch
      %19 = sbr.rel target = $region3
    $region8: #{tpu_custom_call.1} parent=1 // loop_exit
      _
    %711 = vsyncpa [#allocation3], 1
    %s712 = scalar_lea.sflag [#allocation3], 1
    %713 = vsyncpa %s712, 1
    %714 = vsyncpa [#allocation5], 1
    %s715 = scalar_lea.sflag [#allocation5], 1
    %716 = vsyncpa %s715, 1

</llo_original>
